<compile_context>
chip_gen: v5e
topology: v5e:2x2
jax: 0.10.0
libtpu: 0.0.40
codegen_flags: <defaults>
</compile_context>

<pallas_src>
import jax
import jax.numpy as jnp
from jax.experimental import pallas as pl
from jax.experimental.pallas import tpu as pltpu


def _round_up(x, m):
    return ((x + m - 1) // m) * m


def _choose_block_rows(B, A):
    """Rows per block: ~3 MiB of lane-padded policy + side per pipeline buffer."""
    a_pad = _round_up(A, 128)
    bytes_per_row = (a_pad + 128) * 4          # policy + side, both lane-padded in VMEM
    tb = (3 * 1024 * 1024) // bytes_per_row
    tb = max(8, (tb // 8) * 8)
    tb = min(tb, 8192, _round_up(B, 8))
    return tb


def actor_critic_loss(policy, value, action_taken, temporary_difference, r,
                      entropy_beta, *, block_rows=None):
    """policy: [B, A]; value/action_taken/td/r: [B]; returns scalar f32 loss."""
    B, A = policy.shape

    TB = block_rows if block_rows is not None else _choose_block_rows(B, A)
    TB = min(_round_up(max(TB, 8), 8), _round_up(B, 8))

    nblocks = pl.cdiv(B, TB)
    NC = 2 if nblocks > 1 else 1               # "parallel" axis -> both v7x TCs
    n_inner = pl.cdiv(nblocks, NC)

    # One side tensor: td, value, r, bitcast(action) -> single DMA stream.
    action_bits = jax.lax.bitcast_convert_type(
        action_taken.astype(jnp.int32), jnp.float32)
    side = jnp.stack(
        [temporary_difference.astype(jnp.float32),
         value.astype(jnp.float32),
         r.astype(jnp.float32),
         action_bits], axis=1)                                   # [B, 4]

    beta = jnp.full((1, 1), entropy_beta, dtype=jnp.float32)     # runtime scalar

    def row_block(c, i):
        # Clamp so a core's overhang block never indexes past the array; the
        # kernel fully masks those rows anyway.
        return (jnp.minimum(c * n_inner + i, nblocks - 1), 0)

    def kernel(beta_ref, policy_ref, side_ref, out_ref, acc_ref):
        c = pl.program_id(0)
        i = pl.program_id(1)

        @pl.when(i == 0)
        def _():
            acc_ref[...] = jnp.zeros_like(acc_ref)

        pol = policy_ref[...].astype(jnp.float32)                # [TB, A]
        side_blk = side_ref[...]                                 # [TB, 4]
        td = side_blk[:, 0:1]
        val = side_blk[:, 1:2]
        rr = side_blk[:, 2:3]
        act = pltpu.bitcast(side_blk[:, 3:4], jnp.int32)         # [TB, 1]

        # Stable softmax statistics; no full log_softmax / softmax / one-hot.
        m = jnp.max(pol, axis=1, keepdims=True)                  # [TB, 1]
        shifted = pol - m                                        # [TB, A]
        exp_shifted = jnp.exp(shifted)                           # [TB, A]
        sum_exp = jnp.sum(exp_shifted, axis=1, keepdims=True)    # [TB, 1]
        log_sum_exp = jnp.log(sum_exp)                           # [TB, 1]

        # entropy = log(sum_exp) - sum(exp_shifted * shifted) / sum_exp
        entropy = log_sum_exp - (
            jnp.sum(exp_shifted * shifted, axis=1, keepdims=True) / sum_exp)

        # nll = -log_sm[action] = log(sum_exp) - shifted[action]
        col = jax.lax.broadcasted_iota(jnp.int32, (1, A), 1)     # single row
        sel = jnp.sum(jnp.where(col == act, shifted, 0.0),
                      axis=1, keepdims=True)                     # [TB, 1]
        nll = log_sum_exp - sel

        beta_s = beta_ref[0, 0]
        diff = val - rr
        per_row = nll * td - entropy * beta_s + 0.25 * diff * diff   # [TB, 1]

        # Mask ragged tail / overhang blocks (select -> garbage NaN/Inf dropped).
        row0 = (c * n_inner + i) * TB
        rows = row0 + jax.lax.broadcasted_iota(jnp.int32, (TB, 1), 0)
        per_row = jnp.where(rows < B, per_row, 0.0)

        acc_ref[...] += per_row

        @pl.when(i == n_inner - 1)
        def _():
            total = jnp.sum(acc_ref[...])
            sub = jax.lax.broadcasted_iota(jnp.int32, out_ref.shape, 1)
            lane = jax.lax.broadcasted_iota(jnp.int32, out_ref.shape, 2)
            out_ref[...] = jnp.where((sub == 0) & (lane == 0), total, 0.0)

    a_pad = _round_up(A, 128)
    vmem_limit = (2 * TB * (a_pad + 128) * 4   # double-buffered policy + side
                  + TB * 128 * 4               # accumulator scratch
                  + 2 * 8 * 128 * 4            # output blocks
                  + (4 << 20))                 # headroom / compiler scratch
    vmem_limit = int(min(vmem_limit, 64 << 20))

    out = pl.pallas_call(
        kernel,
        out_shape=jax.ShapeDtypeStruct((NC, 8, 128), jnp.float32),
        grid=(NC, n_inner),
        in_specs=[
            pl.BlockSpec(memory_space=pltpu.MemorySpace.SMEM),   # beta (1,1)
            pl.BlockSpec((TB, A), row_block),                    # policy block
            pl.BlockSpec((TB, 4), row_block),                    # td/value/r/action
        ],
        out_specs=pl.BlockSpec((1, 8, 128), lambda c, i: (c, 0, 0)),
        scratch_shapes=[pltpu.VMEM((TB, 1), jnp.float32)],
        compiler_params=pltpu.CompilerParams(
            dimension_semantics=("parallel", "arbitrary"),
            vmem_limit_bytes=vmem_limit),
    )(beta, policy, side)
    return jnp.sum(out)


def _reference_loss(policy, value, action_taken, temporary_difference, r,
                    entropy_beta):
    policy = policy.astype(jnp.float32)
    log_sm = jax.nn.log_softmax(policy, axis=1)
    sm = jax.nn.softmax(policy, axis=1)
    entropy = -jnp.sum(sm * log_sm, axis=1)
    nll = -jnp.take_along_axis(log_sm, action_taken[:, None], axis=1)[:, 0]
    policy_loss = jnp.sum(nll * temporary_difference - entropy * entropy_beta)
    value_loss = 0.25 * jnp.sum(
        (value.astype(jnp.float32) - r.astype(jnp.float32)) ** 2)
    return value_loss + policy_loss


if __name__ == "__main__":
    entropy_beta = 0.01
    key = jax.random.PRNGKey(0)

    def run_case(B, A, key, **kw):
        k1, k2, k3, k4, k5, key = jax.random.split(key, 6)
        policy = jax.random.normal(k1, (B, A), dtype=jnp.float32)
        action = jax.random.randint(k2, (B,), 0, A, dtype=jnp.int32)
        td = jax.random.normal(k3, (B,), dtype=jnp.float32)
        value = jax.random.normal(k4, (B,), dtype=jnp.float32)
        r = jax.random.normal(k5, (B,), dtype=jnp.float32)
        out = jax.block_until_ready(
            actor_critic_loss(policy, value, action, td, r, entropy_beta, **kw))
        ref = _reference_loss(policy, value, action, td, r, entropy_beta)
        assert jnp.allclose(out, ref, rtol=1e-5, atol=5e-4), (B, A, out, ref)
        return key

    key = run_case(8, 16, key)                    # aligned batch, single block
    key = run_case(13, 6, key)                    # ragged batch -> masked tail
    key = run_case(52, 24, key, block_rows=16)    # multi-block grid + 2-way split
    print("KERNEL_OK")
</pallas_src>

<mosaic_0001>
module attributes {stable_mosaic.version = 11 : i64} {
  func.func @kernel(%arg0: i32, %arg1: i32, %arg2: memref<1x1xf32, #tpu.memory_space<smem>>, %arg3: memref<8x16xf32, #tpu.memory_space<vmem>>, %arg4: memref<8x4xf32, #tpu.memory_space<vmem>>, %arg5: memref<1x8x128xf32, #tpu.memory_space<vmem>>, %arg6: memref<8x1xf32, #tpu.memory_space<vmem>>) attributes {dimension_semantics = [#tpu.dimension_semantics<parallel>, #tpu.dimension_semantics<arbitrary>], iteration_bounds = array<i64: 1, 1>, scalar_prefetch = 0 : i64, scratch_operands = 1 : i64, tpu.core_type = #tpu.core_type<tc>, window_params = [{transform_indices = @transform_0, window_bounds = array<i64: 1, 1>}, {transform_indices = @transform_1, window_bounds = array<i64: 8, 16>}, {transform_indices = @transform_2, window_bounds = array<i64: 8, 4>}, {transform_indices = @transform_3, window_bounds = array<i64: 1, 8, 128>}]} {
    %c0_i32 = arith.constant 0 : i32
    %0 = arith.cmpi eq, %arg1, %c0_i32 : i32
    %1 = arith.extui %0 : i1 to i32
    %c0_i32_0 = arith.constant 0 : i32
    %2 = arith.cmpi ne, %1, %c0_i32_0 : i32
    scf.if %2 {
      %cst_19 = arith.constant 0.000000e+00 : f32
      %58 = vector.broadcast %cst_19 : f32 to vector<8x1xf32>
      %c0_20 = arith.constant 0 : index
      %c0_21 = arith.constant 0 : index
      %59 = vector.load %arg6[%c0_20, %c0_21] : memref<8x1xf32, #tpu.memory_space<vmem>>, vector<8x1xf32>
      tpu.vector_store %arg6[%c0_20, %c0_21], %58 {strides = array<i32>} : memref<8x1xf32, #tpu.memory_space<vmem>>, vector<8x1xf32>,
    } else {
    }
    %c0 = arith.constant 0 : index
    %c0_1 = arith.constant 0 : index
    %3 = vector.load %arg3[%c0, %c0_1] : memref<8x16xf32, #tpu.memory_space<vmem>>, vector<8x16xf32>
    %c0_2 = arith.constant 0 : index
    %c0_3 = arith.constant 0 : index
    %4 = vector.load %arg4[%c0_2, %c0_3] : memref<8x4xf32, #tpu.memory_space<vmem>>, vector<8x4xf32>
    %5 = vector.extract_strided_slice %4 {offsets = [0, 0], sizes = [8, 1], strides = [1, 1]} : vector<8x4xf32> to vector<8x1xf32>
    %6 = vector.extract_strided_slice %4 {offsets = [0, 1], sizes = [8, 1], strides = [1, 1]} : vector<8x4xf32> to vector<8x1xf32>
    %7 = vector.extract_strided_slice %4 {offsets = [0, 2], sizes = [8, 1], strides = [1, 1]} : vector<8x4xf32> to vector<8x1xf32>
    %8 = vector.extract_strided_slice %4 {offsets = [0, 3], sizes = [8, 1], strides = [1, 1]} : vector<8x4xf32> to vector<8x1xf32>
    %9 = tpu.bitcast %8 : vector<8x1xf32> -> vector<8x1xi32>
    %cst = arith.constant dense<0xFF800000> : vector<8xf32>
    %10 = vector.multi_reduction <maximumf>, %3, %cst [1] : vector<8x16xf32> to vector<8xf32>
    %11 = vector.shape_cast %10 : vector<8xf32> to vector<8x1xf32>
    %12 = vector.broadcast %11 : vector<8x1xf32> to vector<8x16xf32>
    %13 = arith.subf %3, %12 : vector<8x16xf32>
    %14 = math.exp %13 : vector<8x16xf32>
    %cst_4 = arith.constant dense<0.000000e+00> : vector<8xf32>
    %15 = vector.multi_reduction <add>, %14, %cst_4 [1] : vector<8x16xf32> to vector<8xf32>
    %16 = vector.shape_cast %15 : vector<8xf32> to vector<8x1xf32>
    %17 = math.log %16 : vector<8x1xf32>
    %18 = arith.mulf %14, %13 : vector<8x16xf32>
    %cst_5 = arith.constant dense<0.000000e+00> : vector<8xf32>
    %19 = vector.multi_reduction <add>, %18, %cst_5 [1] : vector<8x16xf32> to vector<8xf32>
    %20 = vector.shape_cast %19 : vector<8xf32> to vector<8x1xf32>
    %21 = arith.divf %20, %16 : vector<8x1xf32>
    %22 = arith.subf %17, %21 : vector<8x1xf32>
    %23 = tpu.iota {dimensions = array<i32: 1>} : vector<1x16xi32>
    %24 = vector.broadcast %23 : vector<1x16xi32> to vector<8x16xi32>
    %25 = vector.broadcast %9 : vector<8x1xi32> to vector<8x16xi32>
    %26 = arith.cmpi eq, %24, %25 : vector<8x16xi32>
    %cst_6 = arith.constant 0.000000e+00 : f32
    %27 = vector.broadcast %cst_6 : f32 to vector<8x16xf32>
    %28 = arith.select %26, %13, %27 : vector<8x16xi1>, vector<8x16xf32>
    %cst_7 = arith.constant dense<0.000000e+00> : vector<8xf32>
    %29 = vector.multi_reduction <add>, %28, %cst_7 [1] : vector<8x16xf32> to vector<8xf32>
    %30 = vector.shape_cast %29 : vector<8xf32> to vector<8x1xf32>
    %31 = arith.subf %17, %30 : vector<8x1xf32>
    %c0_8 = arith.constant 0 : index
    %c0_9 = arith.constant 0 : index
    %32 = memref.load %arg2[%c0_8, %c0_9] : memref<1x1xf32, #tpu.memory_space<smem>>
    %33 = arith.subf %6, %7 : vector<8x1xf32>
    %34 = arith.mulf %31, %5 : vector<8x1xf32>
    %35 = vector.broadcast %32 : f32 to vector<8x1xf32>
    %36 = arith.mulf %22, %35 : vector<8x1xf32>
    %37 = arith.subf %34, %36 : vector<8x1xf32>
    %cst_10 = arith.constant 2.500000e-01 : f32
    %38 = vector.broadcast %cst_10 : f32 to vector<8x1xf32>
    %39 = arith.mulf %38, %33 : vector<8x1xf32>
    %40 = arith.mulf %39, %33 : vector<8x1xf32>
    %41 = arith.addf %37, %40 : vector<8x1xf32>
    %c1_i32 = arith.constant 1 : i32
    %42 = arith.muli %arg0, %c1_i32 : i32
    %43 = arith.addi %42, %arg1 : i32
    %c8_i32 = arith.constant 8 : i32
    %44 = arith.muli %43, %c8_i32 : i32
    %45 = tpu.iota {dimensions = array<i32: 0>} : vector<8x1xi32>
    %46 = vector.broadcast %44 : i32 to vector<8x1xi32>
    %47 = arith.addi %46, %45 : vector<8x1xi32>
    %c8_i32_11 = arith.constant 8 : i32
    %48 = vector.broadcast %c8_i32_11 : i32 to vector<8x1xi32>
    %49 = arith.cmpi slt, %47, %48 : vector<8x1xi32>
    %cst_12 = arith.constant 0.000000e+00 : f32
    %50 = vector.broadcast %cst_12 : f32 to vector<8x1xf32>
    %51 = arith.select %49, %41, %50 : vector<8x1xi1>, vector<8x1xf32>
    %c0_13 = arith.constant 0 : index
    %c0_14 = arith.constant 0 : index
    %52 = vector.load %arg6[%c0_13, %c0_14] : memref<8x1xf32, #tpu.memory_space<vmem>>, vector<8x1xf32>
    %53 = arith.addf %52, %51 : vector<8x1xf32>
    %c0_15 = arith.constant 0 : index
    %c0_16 = arith.constant 0 : index
    %54 = vector.load %arg6[%c0_15, %c0_16] : memref<8x1xf32, #tpu.memory_space<vmem>>, vector<8x1xf32>
    tpu.vector_store %arg6[%c0_15, %c0_16], %53 {strides = array<i32>} : memref<8x1xf32, #tpu.memory_space<vmem>>, vector<8x1xf32>,
    %c0_i32_17 = arith.constant 0 : i32
    %55 = arith.cmpi eq, %arg1, %c0_i32_17 : i32
    %56 = arith.extui %55 : i1 to i32
    %c0_i32_18 = arith.constant 0 : i32
    %57 = arith.cmpi ne, %56, %c0_i32_18 : i32
    scf.if %57 {
      %c0_19 = arith.constant 0 : index
      %c0_20 = arith.constant 0 : index
      %58 = vector.load %arg6[%c0_19, %c0_20] : memref<8x1xf32, #tpu.memory_space<vmem>>, vector<8x1xf32>
      %59 = vector.shape_cast %58 : vector<8x1xf32> to vector<1x8x1xf32>
      %cst_21 = arith.constant dense<0.000000e+00> : vector<1xf32>
      %60 = vector.multi_reduction <add>, %59, %cst_21 [1, 2] : vector<1x8x1xf32> to vector<1xf32>
      %61 = vector.shape_cast %60 : vector<1xf32> to vector<1x1x1xf32>
      %62 = vector.extract %61[0, 0, 0] : f32 from vector<1x1x1xf32>
      %63 = tpu.iota {dimensions = array<i32: 1>} : vector<1x8x128xi32>
      %64 = tpu.iota {dimensions = array<i32: 2>} : vector<1x8x128xi32>
      %c0_i32_22 = arith.constant 0 : i32
      %65 = vector.broadcast %c0_i32_22 : i32 to vector<1x8x128xi32>
      %66 = arith.cmpi eq, %63, %65 : vector<1x8x128xi32>
      %c0_i32_23 = arith.constant 0 : i32
      %67 = vector.broadcast %c0_i32_23 : i32 to vector<1x8x128xi32>
      %68 = arith.cmpi eq, %64, %67 : vector<1x8x128xi32>
      %69 = arith.andi %66, %68 : vector<1x8x128xi1>
      %cst_24 = arith.constant 0.000000e+00 : f32
      %70 = vector.broadcast %62 : f32 to vector<1x8x128xf32>
      %71 = vector.broadcast %cst_24 : f32 to vector<1x8x128xf32>
      %72 = arith.select %69, %70, %71 : vector<1x8x128xi1>, vector<1x8x128xf32>
      %c0_25 = arith.constant 0 : index
      %c0_26 = arith.constant 0 : index
      %c0_27 = arith.constant 0 : index
      %73 = vector.load %arg5[%c0_25, %c0_26, %c0_27] : memref<1x8x128xf32, #tpu.memory_space<vmem>>, vector<1x8x128xf32>
      tpu.vector_store %arg5[%c0_25, %c0_26, %c0_27], %72 {strides = array<i32>} : memref<1x8x128xf32, #tpu.memory_space<vmem>>, vector<1x8x128xf32>,
    } else {
    }
    return
  }
  func.func @transform_0(%arg0: i32, %arg1: i32) -> (i32, i32) {
    %c0_i32 = arith.constant 0 : i32
    %c0_i32_0 = arith.constant 0 : i32
    %c0_i32_1 = arith.constant 0 : i32
    return %c0_i32, %c0_i32_0 : i32, i32
  }
  func.func @transform_1(%arg0: i32, %arg1: i32) -> (i32, i32) {
    %c1_i32 = arith.constant 1 : i32
    %0 = arith.muli %arg0, %c1_i32 : i32
    %1 = arith.addi %0, %arg1 : i32
    %c0_i32 = arith.constant 0 : i32
    %2 = arith.minsi %1, %c0_i32 : i32
    %c0_i32_0 = arith.constant 0 : i32
    %c0_i32_1 = arith.constant 0 : i32
    return %2, %c0_i32_0 : i32, i32
  }
  func.func @transform_2(%arg0: i32, %arg1: i32) -> (i32, i32) {
    %c1_i32 = arith.constant 1 : i32
    %0 = arith.muli %arg0, %c1_i32 : i32
    %1 = arith.addi %0, %arg1 : i32
    %c0_i32 = arith.constant 0 : i32
    %2 = arith.minsi %1, %c0_i32 : i32
    %c0_i32_0 = arith.constant 0 : i32
    %c0_i32_1 = arith.constant 0 : i32
    return %2, %c0_i32_0 : i32, i32
  }
  func.func @transform_3(%arg0: i32, %arg1: i32) -> (i32, i32, i32) {
    %c0_i32 = arith.constant 0 : i32
    %c0_i32_0 = arith.constant 0 : i32
    %c0_i32_1 = arith.constant 0 : i32
    return %arg0, %c0_i32, %c0_i32_0 : i32, i32, i32
  }
}

</mosaic_0001>

<llo_original>
// kernel: tpu_custom_call.1
$region0: #{tpu_custom_call.1}
  #allocation0 [shape = 'u32[]', space=smem, size = 0x4, offset = 0x4, fixed_abs, tag = 'smem constant byte address 0x4 - core index']
  #allocation1 [shape = 'u32[72,128]{1,0:T(1,128)}', space=vmem, size = 0x9000, scoped, tag = 'internal scratch']
  #allocation2 [shape = 'f32[8,1]{1,0:T(8,128)}', space=vmem, size = 0x1000, scoped, tag = 'scratch operand']
  #allocation3 [shape = 'f32[1,1]{1,0:T(1,128)S(6)}', space=smem, size = 0x200, scoped, tag = 'scoped memory for tpu_custom_call.1']
  %s0 = inlined_call_operand.<no memory space> [shape: f32[1,1], index: 0, kind: input, shape index: {}]
  %s1 = inlined_call_operand.vmem [shape: f32[8,16], index: 1, kind: input, shape index: {}]
  %s2 = inlined_call_operand.vmem [shape: f32[8,4], index: 2, kind: input, shape index: {}]
  %s3 = inlined_call_operand.hbm [shape: f32[1,8,128], index: 3, kind: output, shape index: {}]
  %s4 = sld [smem:[#allocation0]]
  $region30: #{tpu_custom_call.1} parent=0
    _
  %s6 = ssub.s32 1, %s4
  %s7 = scalar_select 0, %s6, %s4
  %8 = sst [smem:[#allocation3]] %s0
  $region1: #{tpu_custom_call.1} parent=0
    #allocation4 [shape = 'u8[4096]{0}', space=vmem, size = 0x1000, scoped, tag = 'output window, operand 0, single buffered']
    #allocation5 [shape = 's32[1]{0}', space=sflag, size = 0x4, scoped, tag = 'scoped memory for tpu_custom_call.1']
    %9 = vsyncpa [#allocation5], 0
    // Predicated region
    $region2: #{tpu_custom_call.1} parent=1 // pred_check
      _
    $region3: #{tpu_custom_call.1} parent=1 // pred_check_branch
      %11 = sbr.rel (0) target = $region5
    $region4: #{tpu_custom_call.1} parent=1 // pred_region
      _
    $region5: #{tpu_custom_call.1} parent=1 // pred_fallthru
      _
    // Predicated region
    $region6: #{tpu_custom_call.1} parent=1 // pred_check
      _
    $region7: #{tpu_custom_call.1} parent=1 // pred_check_branch
      %13 = sbr.rel (0) target = $region9
    $region8: #{tpu_custom_call.1} parent=1 // pred_region
      %s14 = sadd.s32 0, 0
      %p15 = scmp.lt.s32.totalorder %s14, 0
      %s16 = scalar_select %p15, %s14, 0
      %p17 = scmp.lt.s32.totalorder %s16, 0
      %s18 = scalar_select %p17, %s16, 0
      %s19 = smul.addr %s18, 8
      %s20 = scalar_lea.vmem %s1, %s19
      %s21 = sadd.s32 0, 0
      %p22 = scmp.lt.s32.totalorder %s21, 0
      %s23 = scalar_select %p22, %s21, 0
    $region9: #{tpu_custom_call.1} parent=1 // pred_fallthru
      _
    // Predicated region
    $region10: #{tpu_custom_call.1} parent=1 // pred_check
      _
    $region11: #{tpu_custom_call.1} parent=1 // pred_check_branch
      %25 = sbr.rel (0) target = $region13
    $region12: #{tpu_custom_call.1} parent=1 // pred_region
      %s26 = sadd.s32 0, 0
      %p27 = scmp.lt.s32.totalorder %s26, 0
      %s28 = scalar_select %p27, %s26, 0
      %p29 = scmp.lt.s32.totalorder %s28, 0
      %s30 = scalar_select %p29, %s28, 0
      %s31 = smul.addr %s30, 8
      %s32 = scalar_lea.vmem %s2, %s31
      %s33 = sadd.s32 0, 0
      %p34 = scmp.lt.s32.totalorder %s33, 0
      %s35 = scalar_select %p34, %s33, 0
    $region13: #{tpu_custom_call.1} parent=1 // pred_fallthru
      _
    %s36 = sadd.s32 0, 0
    %p37 = scmp.lt.s32.totalorder %s36, 0
    %s38 = scalar_select %p37, %s36, 0
    %p39 = scmp.lt.s32.totalorder %s38, 0
    %s40 = scalar_select %p39, %s38, 0
    %s41 = smul.addr %s40, 8
    %s42 = scalar_lea.vmem %s1, %s41
    %s43 = sadd.s32 0, 0
    %p44 = scmp.lt.s32.totalorder %s43, 0
    %s45 = scalar_select %p44, %s43, 0
    %p46 = scmp.lt.s32.totalorder %s45, 0
    %s47 = scalar_select %p46, %s45, 0
    %s48 = smul.addr %s47, 8
    %s49 = scalar_lea.vmem %s2, %s48
    %s50 = sadd.s32 0, 0
    %p51 = scmp.lt.s32.totalorder %s50, 0
    %s52 = scalar_select %p51, %s50, 0
    %p53 = scmp.lt.s32.totalorder %s52, 0
    %s54 = scalar_select %p53, %s52, 0
    %s55 = smul.addr %s54, 8
    %s56 = scalar_lea.vmem %s1, %s55
    %s57 = sadd.s32 0, 0
    %p58 = scmp.lt.s32.totalorder %s57, 0
    %s59 = scalar_select %p58, %s57, 0
    %s60 = sadd.s32 0, 0
    %p61 = scmp.lt.s32.totalorder %s60, 0
    %s62 = scalar_select %p61, %s60, 0
    %p63 = scmp.lt.s32.totalorder %s62, 0
    %s64 = scalar_select %p63, %s62, 0
    %s65 = smul.addr %s64, 8
    %s66 = scalar_lea.vmem %s2, %s65
    %s67 = sadd.s32 0, 0
    %p68 = scmp.lt.s32.totalorder %s67, 0
    %s69 = scalar_select %p68, %s67, 0
    %p70 = scmp.eq.s32.totalorder 0, 0
    // Predicated region
    $region14: #{tpu_custom_call.1} parent=1 // pred_check
      %p71 = pneg %p70
    $region15: #{tpu_custom_call.1} parent=1 // pred_check_branch
      %73 = sbr.rel (%p71) target = $region17
    $region16: #{tpu_custom_call.1} parent=1 // pred_region
      %vm74 = vcmask 7168
      %75 = vst.msk [vmem:[#allocation2] sm:$0xff] %vm74, 0.0
    $region17: #{tpu_custom_call.1} parent=1 // pred_fallthru
      _
    %v76 = vld [vmem:[%s56] sm:$0xff]
    %v77 = vld [vmem:[%s66] sm:$0xff]
    %vm79 = vcmask 130048
    %v80 = vsel %vm79, %v76, -inf
    %81 = vmax.xlane.f32.xlu0 %v80
    %v82 = vpop.xlane.xlu0 %81
    %v83 = vsub.f32 %v76, %v82
    %v84 = vmul.f32 %v83, 1.442695
    %v85 = vpow.pop %v84
    %v86 = vsel %vm79, %v85, 0.0
    %87 = vadd.xlane.f32.xlu0 %v86
    %v88 = vpop.xlane.xlu0 %87
    %v89 = vlog2.pop %v88
    %v90 = vmul.f32 %v89, 0.6931472
    %v91 = vmul.f32 %v85, %v83
    %v92 = vsel %vm79, %v91, 0.0
    %93 = vadd.xlane.f32.xlu0 %v92
    %v94 = vpop.xlane.xlu0 %93
    %v95 = vrcp.pop %v88
    %v96 = vmul.f32 %v88, %v95
    %v97 = vsub.f32 1.0, %v96
    %v98 = vmul.f32 %v95, %v97
    %v99 = vadd.f32 %v95, %v98
    %vm100 = vweird.f32 %v88
    %vm101 = vweird.f32 %v95
    %vm102 = vmor %vm100, %vm101
    %v103 = vsel %vm102, %v95, %v99
    %v104 = vand.u32 2147483647, %v88
    %vm105 = vcmp.eq.f32.partialorder %v104, 8.507059e+37
    %v106 = vand.u32 %v88, 2147483648
    %v107 = vor.u32 1.1754944e-38, %v106
    %v108 = vsel %vm105, %v107, %v103
    %v109 = vmul.f32 %v94, %v108
    %v110 = vsub.f32 %v90, %v109
    %v111 = vlaneseq
    %v112 = vand.u32 %v111, 127
    %113 = vset.pattern.permute.xlu0 3
    %114 = vperm.xlu0 %113, %v77
    %v115 = vpop.permute.xlu0 %114
    %vm116 = vcmp.eq.s32.totalorder %v112, %v115
    %v117 = vsel %vm116, %v83, 0.0
    %v118 = vsel %vm79, %v117, 0.0
    %119 = vadd.xlane.f32.xlu0 %v118
    %v120 = vpop.xlane.xlu0 %119
    %v121 = vsub.f32 %v90, %v120
    %s122 = sld [smem:[#allocation3]]
    %123 = vrot.lane.b32.xlu0 %v77, 127
    %v124 = vpop.permute.xlu0 %123
    %v126 = vsub.f32 %v77, %v124
    %v127 = vmul.f32 %v121, %v77
    %v128 = vstv %s122
    %v129 = vmul.f32 %v110, %v128
    %v130 = vsub.f32 %v127, %v129
    %v131 = vmul.f32 %v126, 0.25
    %v132 = vmul.f32 %v131, %v126
    %134 = vrot.lane.b32.xlu0 %v132, 127
    %v135 = vpop.permute.xlu0 %134
    %v137 = vadd.f32 %v130, %v135
    %s138 = sadd.s32 0, 0
    %s139 = smul.u32 %s138, 8
    %v140 = vlaneseq
    %v141 = vshrl.u32 %v140, 7
    %v142 = vstv %s139
    %v143 = vadd.s32 %v142, %v141
    %vm144 = vcmp.lt.s32.totalorder %v143, 8
    %v145 = vsel %vm144, %v137, 0.0
    %v146 = vld [vmem:[#allocation2] sm:$0xff]
    %v147 = vadd.f32 %v146, %v145
    %vm148 = vcmask 7168
    %149 = vst.msk [vmem:[#allocation2] sm:$0xff] %vm148, %v147
    // Predicated region
    $region18: #{tpu_custom_call.1} parent=1 // pred_check
      %p150 = pneg %p70
    $region19: #{tpu_custom_call.1} parent=1 // pred_check_branch
      %152 = sbr.rel (%p150) target = $region21
    $region20: #{tpu_custom_call.1} parent=1 // pred_region
      %v153 = vld [vmem:[#allocation2] sm:$0xff]
      %v154 = vsel %vm148, %v153, 0.0
      %155 = vadd.xlane.f32.xlu0 %v154
      %v156 = vpop.xlane.xlu0 %155
      %v157 = vrot.slane %v156, 4
      %v158 = vadd.f32 %v156, %v157
      %v159 = vrot.slane %v158, 2
      %v160 = vadd.f32 %v158, %v159
      %v161 = vrot.slane %v160, 1
      %v162 = vadd.f32 %v160, %v161
      %s163 = vtos %v162
      %vm164 = vcmp.eq.s32.totalorder %v141, 0
      %vm165 = vcmp.eq.s32.totalorder %v112, 0
      %vm166 = vmand %vm164, %vm165
      %v167 = vstv %s163
      %v168 = vsel %vm166, %v167, 0.0
      %169 = vst [vmem:[#allocation4] sm:$0xff] %v168
    $region21: #{tpu_custom_call.1} parent=1 // pred_fallthru
      _
    // Predicated region
    $region22: #{tpu_custom_call.1} parent=1 // pred_check
      _
    $region23: #{tpu_custom_call.1} parent=1 // pred_check_branch
      %171 = sbr.rel (0) target = $region25
    $region24: #{tpu_custom_call.1} parent=1 // pred_region
      %173 = vsyncadd [#allocation5], 0
      %s175 = sshll.u32 [#allocation4], 4
      %s176 = int_to_ptr.vmem [resolvable:$true] %s175
      %s177 = sshll.u32 %s3, 4
      %s178 = int_to_ptr.hbm [resolvable:$true] %s177
      %180 = dma.vmem_to_hbm [thread:$0]  %s176, 128, %s178, [#allocation5]
    $region25: #{tpu_custom_call.1} parent=1 // pred_fallthru
      _
    // Predicated region
    $region26: #{tpu_custom_call.1} parent=1 // pred_check
      _
    $region27: #{tpu_custom_call.1} parent=1 // pred_check_branch
      %182 = sbr.rel (0) target = $region29
    $region28: #{tpu_custom_call.1} parent=1 // pred_region
      %184 = dma.done [#allocation5], 128
    $region29: #{tpu_custom_call.1} parent=1 // pred_fallthru
      _
    %185 = vsyncpa [#allocation5], 1

</llo_original>
